<compile_context>
chip_gen: v5e
topology: v5e:2x2
jax: 0.10.0
libtpu: 0.0.40
codegen_flags: <defaults>
</compile_context>

<pallas_src>
import jax
import jax.numpy as jnp
from jax.experimental import pallas as pl
from jax.experimental.pallas import tpu as pltpu


def _multiply_c_kernel(xi_ref, xj_ref, eij_ref, w1_ref, w2_ref, o_ref):
    # z = x_j @ W1t + e_ij @ W2t   (MXU, f32 accumulation; weights are already
    # transposed + block-diagonal-packed by the wrapper, so this is plain x @ W).
    z = jnp.dot(xj_ref[...], w1_ref[...], preferred_element_type=jnp.float32)
    z = z + jnp.dot(eij_ref[...], w2_ref[...], preferred_element_type=jnp.float32)
    # Elementwise epilogue in f32 (VPU mul + EUP tanh), then cast.
    xi = xi_ref[...].astype(jnp.float32)
    o_ref[...] = jnp.tanh(z * xi).astype(o_ref.dtype)


def multiply_c_forward(x_i, x_j, e_ij, weight, *, tile_rows=None):
    """x_i, x_j, e_ij: [N, in_size]; weight: [in_size, in_size*2] (PyTorch Linear layout)."""
    n, in_size = x_i.shape
    assert x_j.shape == (n, in_size) and e_ij.shape == (n, in_size)
    out_feat, in_feat = weight.shape
    assert out_feat == in_size and in_feat == 2 * in_size, \
        "kernel fuses agg_q = concat of exactly (x_j, e_ij), i.e. dim_coff == 2"

    dtype = x_i.dtype
    itemsize = jnp.dtype(dtype).itemsize
    # Native sublane tile per dtype: f32 -> 8, bf16 -> 16, int8/fp8 -> 32.
    sublane = {4: 8, 2: 16, 1: 32}.get(itemsize, 8)

    # ---- lane packing: fold `pack` logical rows into the 128-lane dim -------
    pack = 128 // in_size if (in_size < 128 and 128 % in_size == 0) else 1
    lane_dim = pack * in_size

    # Pre-transposed weight halves (one-time wrapper op).
    w1t = weight[:, :in_size].T        # multiplies x_j
    w2t = weight[:, in_size:].T        # multiplies e_ij
    if pack > 1:
        eye = jnp.eye(pack, dtype=weight.dtype)
        w1t = jnp.kron(eye, w1t)       # [lane_dim, lane_dim] block-diagonal
        w2t = jnp.kron(eye, w2t)

    n_pad = (-n) % pack
    if n_pad:
        padcfg = ((0, n_pad), (0, 0))
        x_i = jnp.pad(x_i, padcfg)
        x_j = jnp.pad(x_j, padcfg)
        e_ij = jnp.pad(e_ij, padcfg)
    n_packed = (n + n_pad) // pack
    xi_p = x_i.reshape(n_packed, lane_dim)
    xj_p = x_j.reshape(n_packed, lane_dim)
    eij_p = e_ij.reshape(n_packed, lane_dim)

    # ---- tile sizing (packed-row units) --------------------------------------
    if tile_rows is None:
        bytes_per_packed_row = 4 * lane_dim * itemsize     # x_i, x_j, e_ij, out tiles
        vmem_budget = 8 * 1024 * 1024                      # double-buffered working set,
        tile_p = vmem_budget // (2 * bytes_per_packed_row)  # safe on v5e/v6e/v7x defaults
    else:
        tile_p = max(1, tile_rows // pack)
    # Keep >= 2 grid steps when there is enough work so the "parallel" row axis
    # can be split across v7x's two TensorCores.
    if n_packed > 2 * sublane:
        half = ((pl.cdiv(n_packed, 2) + sublane - 1) // sublane) * sublane
        tile_p = min(tile_p, half)
    tile_p = max(sublane, min(tile_p, n_packed))
    if tile_p < n_packed:
        tile_p = max(sublane, (tile_p // sublane) * sublane)
    else:
        tile_p = n_packed                                   # full-extent block is allowed

    grid = (pl.cdiv(n_packed, tile_p),)
    row_spec = pl.BlockSpec((tile_p, lane_dim), lambda i: (i, 0))
    # Constant block index -> weight halves are DMA'd once and stay VMEM-resident.
    w_spec = pl.BlockSpec((lane_dim, lane_dim), lambda i: (0, 0))

    out_p = pl.pallas_call(
        _multiply_c_kernel,
        out_shape=jax.ShapeDtypeStruct((n_packed, lane_dim), dtype),
        grid=grid,
        in_specs=[row_spec, row_spec, row_spec, w_spec, w_spec],
        out_specs=row_spec,
        compiler_params=pltpu.CompilerParams(
            dimension_semantics=("parallel",)),
    )(xi_p, xj_p, eij_p, w1t, w2t)

    out = out_p.reshape(n_packed * pack, in_size)
    if n_pad:
        out = out[:n]
    return out


if __name__ == "__main__":
    # Small shapes consistent with the module: N edge rows, in_size features, dim_coff=2.
    N = 256
    in_size = 32
    dim_coff = 2  # agg_q = concat of (x_j, e_ij)

    key = jax.random.PRNGKey(0)
    k_xi, k_xj, k_e, k_w = jax.random.split(key, 4)

    x_i = jax.random.normal(k_xi, (N, in_size), dtype=jnp.float32)
    x_j = jax.random.normal(k_xj, (N, in_size), dtype=jnp.float32)
    e_ij = jax.random.normal(k_e, (N, in_size), dtype=jnp.float32)

    # PyTorch-style Linear weight: [out=in_size, in=in_size*dim_coff], U(-1/sqrt(fan_in), ...).
    fan_in = in_size * dim_coff
    bound = 1.0 / (fan_in ** 0.5)
    weight = jax.random.uniform(
        k_w, (in_size, fan_in), dtype=jnp.float32, minval=-bound, maxval=bound)

    # Default tile sizing: N=256, pack=4 -> 64 packed rows, 2 grid steps (exercises
    # the lane-packed, row-tiled, pipelined path).
    out = multiply_c_forward(x_i, x_j, e_ij, weight)
    out = jax.block_until_ready(out)

    # Reference in plain JAX (same math as the PyTorch module), f32-exact matmul.
    q_ref = jnp.concatenate([x_j, e_ij], axis=-1)
    ref = jnp.tanh(jnp.dot(q_ref, weight.T, precision=jax.lax.Precision.HIGHEST) * x_i)
    assert out.shape == (N, in_size)
    assert jnp.allclose(out, ref, atol=2e-5, rtol=1e-5)

    print("KERNEL_OK")
</pallas_src>

<mosaic_0001>
module attributes {stable_mosaic.version = 11 : i64} {
  func.func @_multiply_c_kernel(%arg0: i32, %arg1: memref<32x128xf32, #tpu.memory_space<vmem>>, %arg2: memref<32x128xf32, #tpu.memory_space<vmem>>, %arg3: memref<32x128xf32, #tpu.memory_space<vmem>>, %arg4: memref<128x128xf32, #tpu.memory_space<vmem>>, %arg5: memref<128x128xf32, #tpu.memory_space<vmem>>, %arg6: memref<32x128xf32, #tpu.memory_space<vmem>>) attributes {dimension_semantics = [#tpu.dimension_semantics<parallel>], iteration_bounds = array<i64: 2>, scalar_prefetch = 0 : i64, scratch_operands = 0 : i64, tpu.core_type = #tpu.core_type<tc>, window_params = [{transform_indices = @transform_0, window_bounds = array<i64: 32, 128>}, {transform_indices = @transform_1, window_bounds = array<i64: 32, 128>}, {transform_indices = @transform_2, window_bounds = array<i64: 32, 128>}, {pipeline_mode = #tpu.pipeline_mode<synchronous>, transform_indices = @transform_3, window_bounds = array<i64: 128, 128>}, {pipeline_mode = #tpu.pipeline_mode<synchronous>, transform_indices = @transform_4, window_bounds = array<i64: 128, 128>}, {transform_indices = @transform_5, window_bounds = array<i64: 32, 128>}]} {
    %c0 = arith.constant 0 : index
    %c0_0 = arith.constant 0 : index
    %0 = vector.load %arg2[%c0, %c0_0] : memref<32x128xf32, #tpu.memory_space<vmem>>, vector<32x128xf32>
    %c0_1 = arith.constant 0 : index
    %c0_2 = arith.constant 0 : index
    %1 = vector.load %arg4[%c0_1, %c0_2] : memref<128x128xf32, #tpu.memory_space<vmem>>, vector<128x128xf32>
    %cst = arith.constant dense<0.000000e+00> : vector<32x128xf32>
    %2 = tpu.matmul %0, %1, %cst {dimension_numbers = #tpu.dot_dimension_numbers<[1], [0], [0], [1], [0, 0, 1, 1], [], []>} : vector<32x128xf32>, vector<128x128xf32>, vector<32x128xf32> -> vector<32x128xf32>
    %c0_3 = arith.constant 0 : index
    %c0_4 = arith.constant 0 : index
    %3 = vector.load %arg3[%c0_3, %c0_4] : memref<32x128xf32, #tpu.memory_space<vmem>>, vector<32x128xf32>
    %c0_5 = arith.constant 0 : index
    %c0_6 = arith.constant 0 : index
    %4 = vector.load %arg5[%c0_5, %c0_6] : memref<128x128xf32, #tpu.memory_space<vmem>>, vector<128x128xf32>
    %cst_7 = arith.constant dense<0.000000e+00> : vector<32x128xf32>
    %5 = tpu.matmul %3, %4, %cst_7 {dimension_numbers = #tpu.dot_dimension_numbers<[1], [0], [0], [1], [0, 0, 1, 1], [], []>} : vector<32x128xf32>, vector<128x128xf32>, vector<32x128xf32> -> vector<32x128xf32>
    %6 = arith.addf %2, %5 : vector<32x128xf32>
    %c0_8 = arith.constant 0 : index
    %c0_9 = arith.constant 0 : index
    %7 = vector.load %arg1[%c0_8, %c0_9] : memref<32x128xf32, #tpu.memory_space<vmem>>, vector<32x128xf32>
    %8 = arith.mulf %6, %7 : vector<32x128xf32>
    %9 = math.tanh %8 : vector<32x128xf32>
    %c0_10 = arith.constant 0 : index
    %c0_11 = arith.constant 0 : index
    %10 = vector.load %arg6[%c0_10, %c0_11] : memref<32x128xf32, #tpu.memory_space<vmem>>, vector<32x128xf32>
    tpu.vector_store %arg6[%c0_10, %c0_11], %9 {strides = array<i32>} : memref<32x128xf32, #tpu.memory_space<vmem>>, vector<32x128xf32>,
    return
  }
  func.func @transform_0(%arg0: i32) -> (i32, i32) {
    %c0_i32 = arith.constant 0 : i32
    %c0_i32_0 = arith.constant 0 : i32
    return %arg0, %c0_i32 : i32, i32
  }
  func.func @transform_1(%arg0: i32) -> (i32, i32) {
    %c0_i32 = arith.constant 0 : i32
    %c0_i32_0 = arith.constant 0 : i32
    return %arg0, %c0_i32 : i32, i32
  }
  func.func @transform_2(%arg0: i32) -> (i32, i32) {
    %c0_i32 = arith.constant 0 : i32
    %c0_i32_0 = arith.constant 0 : i32
    return %arg0, %c0_i32 : i32, i32
  }
  func.func @transform_3(%arg0: i32) -> (i32, i32) {
    %c0_i32 = arith.constant 0 : i32
    %c0_i32_0 = arith.constant 0 : i32
    %c0_i32_1 = arith.constant 0 : i32
    return %c0_i32, %c0_i32_0 : i32, i32
  }
  func.func @transform_4(%arg0: i32) -> (i32, i32) {
    %c0_i32 = arith.constant 0 : i32
    %c0_i32_0 = arith.constant 0 : i32
    %c0_i32_1 = arith.constant 0 : i32
    return %c0_i32, %c0_i32_0 : i32, i32
  }
  func.func @transform_5(%arg0: i32) -> (i32, i32) {
    %c0_i32 = arith.constant 0 : i32
    %c0_i32_0 = arith.constant 0 : i32
    return %arg0, %c0_i32 : i32, i32
  }
}

</mosaic_0001>

<llo_original>
// kernel: tpu_custom_call.1
$region0: #{tpu_custom_call.1}
  #allocation0 [shape = 'u32[]', space=smem, size = 0x4, offset = 0x4, fixed_abs, tag = 'smem constant byte address 0x4 - core index']
  #allocation1 [shape = 'u32[72,128]{1,0:T(1,128)}', space=vmem, size = 0x9000, scoped, tag = 'internal scratch']
  %s0 = inlined_call_operand.hbm [shape: f32[64,128], index: 0, kind: input, shape index: {}]
  %s1 = inlined_call_operand.hbm [shape: f32[64,128], index: 1, kind: input, shape index: {}]
  %s2 = inlined_call_operand.hbm [shape: f32[64,128], index: 2, kind: input, shape index: {}]
  %s3 = inlined_call_operand.hbm [shape: f32[128,128], index: 3, kind: input, shape index: {}]
  %s4 = inlined_call_operand.hbm [shape: f32[128,128], index: 4, kind: input, shape index: {}]
  %s5 = inlined_call_operand.hbm [shape: f32[64,128], index: 5, kind: output, shape index: {}]
  %s6 = sld [smem:[#allocation0]]
  $region73: #{tpu_custom_call.1} parent=0
    _
  %s8 = ssub.s32 1, %s6
  %s9 = scalar_select 0, %s8, %s6
  $region1: #{tpu_custom_call.1} parent=0
    #allocation2 [shape = 'u8[32768]{0}', space=vmem, size = 0x8000, scoped, tag = 'input window, operand 0']
    #allocation3 [shape = 's32[2]{0}', space=sflag, size = 0x8, scoped, tag = 'scoped memory for tpu_custom_call.1']
    #allocation4 [shape = 's32[2]{0}', space=sflag, size = 0x8, scoped, tag = 'scoped memory for tpu_custom_call.1']
    #allocation5 [shape = 'u8[32768]{0}', space=vmem, size = 0x8000, scoped, tag = 'input window, operand 1']
    #allocation6 [shape = 's32[2]{0}', space=sflag, size = 0x8, scoped, tag = 'scoped memory for tpu_custom_call.1']
    #allocation7 [shape = 'u8[32768]{0}', space=vmem, size = 0x8000, scoped, tag = 'input window, operand 2']
    #allocation8 [shape = 'u8[65536]{0}', space=vmem, size = 0x10000, scoped, tag = 'input window, operand 3, single buffered']
    #allocation9 [shape = 's32[1]{0}', space=sflag, size = 0x4, scoped, tag = 'scoped memory for tpu_custom_call.1']
    #allocation10 [shape = 'u8[65536]{0}', space=vmem, size = 0x10000, scoped, tag = 'input window, operand 4, single buffered']
    #allocation11 [shape = 'u8[32768]{0}', space=vmem, size = 0x8000, scoped, tag = 'output window, operand 0']
    %10 = vsyncpa [#allocation3], 0
    %s11 = scalar_lea.sflag [#allocation3], 1
    %12 = vsyncpa %s11, 0
    %13 = vsyncpa [#allocation6], 0
    %s14 = scalar_lea.sflag [#allocation6], 1
    %15 = vsyncpa %s14, 0
    %16 = vsyncpa [#allocation9], 0
    %17 = vsyncpa [#allocation4], 0
    %s18 = scalar_lea.sflag [#allocation4], 1
    %19 = vsyncpa %s18, 0
    loop: start=0, step=1, limit=4
    $region2: #{tpu_custom_call.1} parent=1 // loop_pre_header
      _
    $region3: #{tpu_custom_call.1} parent=1 // loop_header
      %s21 = sphi 0, %s25
      %p22 = scmp.ge.s32.totalorder %s21, 4
      %s31 = sphi 0, %s33
      %s34 = sphi 0, %s31
      %s35 = sphi 0, %s34
      %s51 = sphi 0, %s35
      %s57 = sphi 0, %s59
      %s60 = sphi 0, %s57
      %s61 = sphi 0, %s60
      %s77 = sphi 0, %s61
      %s83 = sphi 0, %s85
      %s86 = sphi 0, %s83
      %s87 = sphi 0, %s86
      %s103 = sphi 0, %s87
      %s107 = sphi 0, %s107
      %s109 = sphi 0, %s107
      %s110 = sphi 0, %s109
      %s124 = sphi 0, %s110
      %s128 = sphi 0, %s128
      %s130 = sphi 0, %s128
      %s131 = sphi 0, %s130
      %s145 = sphi 0, %s131
      %s151 = sphi 0, %s153
      %s154 = sphi 0, %s151
      %s155 = sphi 0, %s154
      %s171 = sphi 0, %s155
    $region4: #{tpu_custom_call.1} parent=1 // loop_header_branch
      %24 = sbr.rel (%p22) target = $region8
    $region5: #{tpu_custom_call.1} parent=1 // loop_body
      %s26 = ssub.s32 %s21, 1
      %s27 = ssub.s32 %s21, 2
      %s28 = sadd.s32 %s21, 1
      %s29 = ssub.s32 %s21, %s28
      %p30 = scmp.eq.s32.totalorder %s29, 0
      %s32 = sadd.s32 %s31, 1
      %s33 = scalar_select %p30, %s31, %s32
      %p36 = pneg %p30
      %p37 = scmp.eq.s32.totalorder %s21, 1
      %p38 = por %p36, %p37
      %p39 = scmp.ne.s32.totalorder %s31, %s34
      %p40 = scmp.eq.s32.totalorder %s21, 0
      %p41 = por %p39, %p40
      %p42 = scmp.ne.s32.totalorder %s31, %s34
      %p43 = scmp.eq.s32.totalorder %s26, 1
      %p44 = por %p42, %p43
      %p45 = scmp.ne.s32.totalorder %s34, %s35
      %p46 = scmp.eq.s32.totalorder %s26, 0
      %p47 = por %p45, %p46
      %p48 = scmp.ne.s32.totalorder %s34, %s35
      %p49 = scmp.eq.s32.totalorder %s27, 1
      %p50 = por %p48, %p49
      %p52 = scmp.ne.s32.totalorder %s35, %s51
      %p53 = scmp.eq.s32.totalorder %s27, 0
      %p54 = por %p52, %p53
      %s55 = ssub.s32 %s21, %s28
      %p56 = scmp.eq.s32.totalorder %s55, 0
      %s58 = sadd.s32 %s57, 1
      %s59 = scalar_select %p56, %s57, %s58
      %p62 = pneg %p56
      %p63 = scmp.eq.s32.totalorder %s21, 1
      %p64 = por %p62, %p63
      %p65 = scmp.ne.s32.totalorder %s57, %s60
      %p66 = scmp.eq.s32.totalorder %s21, 0
      %p67 = por %p65, %p66
      %p68 = scmp.ne.s32.totalorder %s57, %s60
      %p69 = scmp.eq.s32.totalorder %s26, 1
      %p70 = por %p68, %p69
      %p71 = scmp.ne.s32.totalorder %s60, %s61
      %p72 = scmp.eq.s32.totalorder %s26, 0
      %p73 = por %p71, %p72
      %p74 = scmp.ne.s32.totalorder %s60, %s61
      %p75 = scmp.eq.s32.totalorder %s27, 1
      %p76 = por %p74, %p75
      %p78 = scmp.ne.s32.totalorder %s61, %s77
      %p79 = scmp.eq.s32.totalorder %s27, 0
      %p80 = por %p78, %p79
      %s81 = ssub.s32 %s21, %s28
      %p82 = scmp.eq.s32.totalorder %s81, 0
      %s84 = sadd.s32 %s83, 1
      %s85 = scalar_select %p82, %s83, %s84
      %p88 = pneg %p82
      %p89 = scmp.eq.s32.totalorder %s21, 1
      %p90 = por %p88, %p89
      %p91 = scmp.ne.s32.totalorder %s83, %s86
      %p92 = scmp.eq.s32.totalorder %s21, 0
      %p93 = por %p91, %p92
      %p94 = scmp.ne.s32.totalorder %s83, %s86
      %p95 = scmp.eq.s32.totalorder %s26, 1
      %p96 = por %p94, %p95
      %p97 = scmp.ne.s32.totalorder %s86, %s87
      %p98 = scmp.eq.s32.totalorder %s26, 0
      %p99 = por %p97, %p98
      %p100 = scmp.ne.s32.totalorder %s86, %s87
      %p101 = scmp.eq.s32.totalorder %s27, 1
      %p102 = por %p100, %p101
      %p104 = scmp.ne.s32.totalorder %s87, %s103
      %p105 = scmp.eq.s32.totalorder %s27, 0
      %p106 = por %p104, %p105
      %s108 = sadd.s32 %s107, 1
      %p111 = scmp.eq.s32.totalorder %s21, 1
      %p112 = scmp.ne.s32.totalorder %s107, %s109
      %p113 = scmp.eq.s32.totalorder %s21, 0
      %p114 = por %p112, %p113
      %p115 = scmp.ne.s32.totalorder %s107, %s109
      %p116 = scmp.eq.s32.totalorder %s26, 1
      %p117 = por %p115, %p116
      %p118 = scmp.ne.s32.totalorder %s109, %s110
      %p119 = scmp.eq.s32.totalorder %s26, 0
      %p120 = por %p118, %p119
      %p121 = scmp.ne.s32.totalorder %s109, %s110
      %p122 = scmp.eq.s32.totalorder %s27, 1
      %p123 = por %p121, %p122
      %p125 = scmp.ne.s32.totalorder %s110, %s124
      %p126 = scmp.eq.s32.totalorder %s27, 0
      %p127 = por %p125, %p126
      %s129 = sadd.s32 %s128, 1
      %p132 = scmp.eq.s32.totalorder %s21, 1
      %p133 = scmp.ne.s32.totalorder %s128, %s130
      %p134 = scmp.eq.s32.totalorder %s21, 0
      %p135 = por %p133, %p134
      %p136 = scmp.ne.s32.totalorder %s128, %s130
      %p137 = scmp.eq.s32.totalorder %s26, 1
      %p138 = por %p136, %p137
      %p139 = scmp.ne.s32.totalorder %s130, %s131
      %p140 = scmp.eq.s32.totalorder %s26, 0
      %p141 = por %p139, %p140
      %p142 = scmp.ne.s32.totalorder %s130, %s131
      %p143 = scmp.eq.s32.totalorder %s27, 1
      %p144 = por %p142, %p143
      %p146 = scmp.ne.s32.totalorder %s131, %s145
      %p147 = scmp.eq.s32.totalorder %s27, 0
      %p148 = por %p146, %p147
      %s149 = ssub.s32 %s21, %s28
      %p150 = scmp.eq.s32.totalorder %s149, 0
      %s152 = sadd.s32 %s151, 1
      %s153 = scalar_select %p150, %s151, %s152
      %p156 = pneg %p150
      %p157 = scmp.eq.s32.totalorder %s21, 1
      %p158 = por %p156, %p157
      %p159 = scmp.ne.s32.totalorder %s151, %s154
      %p160 = scmp.eq.s32.totalorder %s21, 0
      %p161 = por %p159, %p160
      %p162 = scmp.ne.s32.totalorder %s151, %s154
      %p163 = scmp.eq.s32.totalorder %s26, 1
      %p164 = por %p162, %p163
      %p165 = scmp.ne.s32.totalorder %s154, %s155
      %p166 = scmp.eq.s32.totalorder %s26, 0
      %p167 = por %p165, %p166
      %p168 = scmp.ne.s32.totalorder %s154, %s155
      %p169 = scmp.eq.s32.totalorder %s27, 1
      %p170 = por %p168, %p169
      %p172 = scmp.ne.s32.totalorder %s155, %s171
      %p173 = scmp.eq.s32.totalorder %s27, 0
      %p174 = por %p172, %p173
      %p175 = scmp.le.s32.totalorder 1, %s21
      %p176 = scmp.lt.s32.totalorder %s21, 3
      %p177 = pnand %p175, %p176
      %p178 = pneg %p177
      // Predicated region
      $region9: #{tpu_custom_call.1} parent=5 // pred_check
        _
      $region10: #{tpu_custom_call.1} parent=5 // pred_check_branch
        %180 = sbr.rel (%p177) target = $region12
      $region11: #{tpu_custom_call.1} parent=5 // pred_region
        %s181 = ssub.s32 %s21, 1
        // Predicated region
        $region13: #{tpu_custom_call.1} parent=11 // pred_check
          %p182 = pneg %p120
        $region14: #{tpu_custom_call.1} parent=11 // pred_check_branch
          %184 = sbr.rel (%p182) target = $region16
        $region15: #{tpu_custom_call.1} parent=11 // pred_region
          %186 = vsyncadd [#allocation9], 0
          %s187 = sshll.u32 %s3, 4
          %s188 = int_to_ptr.hbm [resolvable:$true] %s187
          %s189 = sshll.u32 [#allocation8], 4
          %s190 = int_to_ptr.vmem [resolvable:$true] %s189
          %195 = dma.hbm_to_vmem [thread:$0]  %s188, 2048, %s190, [#allocation9], 128, 128, 8
        $region16: #{tpu_custom_call.1} parent=11 // pred_fallthru
          _
        // Predicated region
        $region17: #{tpu_custom_call.1} parent=11 // pred_check
          %p196 = pneg %p141
        $region18: #{tpu_custom_call.1} parent=11 // pred_check_branch
          %198 = sbr.rel (%p196) target = $region20
        $region19: #{tpu_custom_call.1} parent=11 // pred_region
          %200 = vsyncadd [#allocation9], 0
          %s201 = sshll.u32 %s4, 4
          %s202 = int_to_ptr.hbm [resolvable:$true] %s201
          %s203 = sshll.u32 [#allocation10], 4
          %s204 = int_to_ptr.vmem [resolvable:$true] %s203
          %209 = dma.hbm_to_vmem [thread:$0]  %s202, 2048, %s204, [#allocation9], 128, 128, 8
        $region20: #{tpu_custom_call.1} parent=11 // pred_fallthru
          _
      $region12: #{tpu_custom_call.1} parent=5 // pred_fallthru
        _
      %p210 = scmp.lt.s32.totalorder %s21, 2
      // Predicated region
      $region21: #{tpu_custom_call.1} parent=5 // pred_check
        %p211 = pneg %p210
      $region22: #{tpu_custom_call.1} parent=5 // pred_check_branch
        %213 = sbr.rel (%p211) target = $region24
      $region23: #{tpu_custom_call.1} parent=5 // pred_region
        // Predicated region
        $region25: #{tpu_custom_call.1} parent=23 // pred_check
          %p214 = pneg %p41
        $region26: #{tpu_custom_call.1} parent=23 // pred_check_branch
          %216 = sbr.rel (%p214) target = $region28
        $region27: #{tpu_custom_call.1} parent=23 // pred_region
          %s217 = sand.u32 %s31, 1
          %s218 = scalar_lea.sflag [#allocation3], %s217
          %s219 = sand.u32 %s31, 1
          %s220 = smul.addr %s219, 32
          %s221 = scalar_lea.vmem [#allocation2], %s220
          %s222 = smul.u32 4, %s21
          %224 = vsyncadd %s218, 0
          %s225 = smul.addr %s222, 8
          %s226 = scalar_lea.hbm %s0, %s225
          %s227 = sshll.u32 %s226, 4
          %s228 = int_to_ptr.hbm [resolvable:$true] %s227
          %s229 = sshll.u32 %s221, 4
          %s230 = int_to_ptr.vmem [resolvable:$true] %s229
          %235 = dma.hbm_to_vmem [thread:$0]  %s228, 512, %s230, %s218, 128, 128, 8
        $region28: #{tpu_custom_call.1} parent=23 // pred_fallthru
          _
        // Predicated region
        $region29: #{tpu_custom_call.1} parent=23 // pred_check
          %p236 = pneg %p67
        $region30: #{tpu_custom_call.1} parent=23 // pred_check_branch
          %238 = sbr.rel (%p236) target = $region32
        $region31: #{tpu_custom_call.1} parent=23 // pred_region
          %s239 = sand.u32 %s21, 1
          %s240 = scalar_lea.sflag [#allocation6], %s239
          %s241 = sand.u32 %s57, 1
          %s242 = smul.addr %s241, 32
          %s243 = scalar_lea.vmem [#allocation5], %s242
          %s244 = smul.u32 4, %s21
          %246 = vsyncadd %s240, 0
          %s247 = smul.addr %s244, 8
          %s248 = scalar_lea.hbm %s1, %s247
          %s249 = sshll.u32 %s248, 4
          %s250 = int_to_ptr.hbm [resolvable:$true] %s249
          %s251 = sshll.u32 %s243, 4
          %s252 = int_to_ptr.vmem [resolvable:$true] %s251
          %257 = dma.hbm_to_vmem [thread:$0]  %s250, 512, %s252, %s240, 128, 128, 8
        $region32: #{tpu_custom_call.1} parent=23 // pred_fallthru
          _
        // Predicated region
        $region33: #{tpu_custom_call.1} parent=23 // pred_check
          %p258 = pneg %p93
        $region34: #{tpu_custom_call.1} parent=23 // pred_check_branch
          %260 = sbr.rel (%p258) target = $region36
        $region35: #{tpu_custom_call.1} parent=23 // pred_region
          %s261 = sand.u32 %s21, 1
          %s262 = scalar_lea.sflag [#allocation6], %s261
          %s263 = sand.u32 %s83, 1
          %s264 = smul.addr %s263, 32
          %s265 = scalar_lea.vmem [#allocation7], %s264
          %s266 = smul.u32 4, %s21
          %268 = vsyncadd %s262, 0
          %s269 = smul.addr %s266, 8
          %s270 = scalar_lea.hbm %s2, %s269
          %s271 = sshll.u32 %s270, 4
          %s272 = int_to_ptr.hbm [resolvable:$true] %s271
          %s273 = sshll.u32 %s265, 4
          %s274 = int_to_ptr.vmem [resolvable:$true] %s273
          %279 = dma.hbm_to_vmem [thread:$0]  %s272, 512, %s274, %s262, 128, 128, 8
        $region36: #{tpu_custom_call.1} parent=23 // pred_fallthru
          _
      $region24: #{tpu_custom_call.1} parent=5 // pred_fallthru
        _
      %p280 = scmp.le.s32.totalorder 1, %s21
      %p281 = scmp.lt.s32.totalorder %s21, 3
      %p282 = pnand %p280, %p281
      %p283 = pneg %p282
      // Predicated region
      $region37: #{tpu_custom_call.1} parent=5 // pred_check
        _
      $region38: #{tpu_custom_call.1} parent=5 // pred_check_branch
        %285 = sbr.rel (%p282) target = $region40
      $region39: #{tpu_custom_call.1} parent=5 // pred_region
        %s286 = ssub.s32 %s21, 1
        %s287 = sand.u32 %s34, 1
        %s288 = scalar_lea.sflag [#allocation3], %s287
        %s289 = sand.u32 %s34, 1
        %s290 = smul.addr %s289, 32
        %s291 = scalar_lea.vmem [#allocation2], %s290
        // Predicated region
        $region41: #{tpu_custom_call.1} parent=39 // pred_check
          %p292 = pneg %p47
        $region42: #{tpu_custom_call.1} parent=39 // pred_check_branch
          %294 = sbr.rel (%p292) target = $region44
        $region43: #{tpu_custom_call.1} parent=39 // pred_region
          %296 = dma.done %s288, 512
        $region44: #{tpu_custom_call.1} parent=39 // pred_fallthru
          _
        %s297 = sand.u32 %s26, 1
        %s298 = scalar_lea.sflag [#allocation6], %s297
        %s299 = sand.u32 %s60, 1
        %s300 = smul.addr %s299, 32
        %s301 = scalar_lea.vmem [#allocation5], %s300
        // Predicated region
        $region45: #{tpu_custom_call.1} parent=39 // pred_check
          %p302 = pneg %p73
        $region46: #{tpu_custom_call.1} parent=39 // pred_check_branch
          %304 = sbr.rel (%p302) target = $region48
        $region47: #{tpu_custom_call.1} parent=39 // pred_region
          %306 = dma.done %s298, 512
        $region48: #{tpu_custom_call.1} parent=39 // pred_fallthru
          _
        %s307 = sand.u32 %s26, 1
        %s308 = scalar_lea.sflag [#allocation6], %s307
        %s309 = sand.u32 %s86, 1
        %s310 = smul.addr %s309, 32
        %s311 = scalar_lea.vmem [#allocation7], %s310
        // Predicated region
        $region49: #{tpu_custom_call.1} parent=39 // pred_check
          %p312 = pneg %p99
        $region50: #{tpu_custom_call.1} parent=39 // pred_check_branch
          %314 = sbr.rel (%p312) target = $region52
        $region51: #{tpu_custom_call.1} parent=39 // pred_region
          %316 = dma.done %s308, 512
        $region52: #{tpu_custom_call.1} parent=39 // pred_fallthru
          _
        // Predicated region
        $region53: #{tpu_custom_call.1} parent=39 // pred_check
          %p317 = pneg %p120
        $region54: #{tpu_custom_call.1} parent=39 // pred_check_branch
          %319 = sbr.rel (%p317) target = $region56
        $region55: #{tpu_custom_call.1} parent=39 // pred_region
          %321 = dma.done [#allocation9], 2048
        $region56: #{tpu_custom_call.1} parent=39 // pred_fallthru
          _
        // Predicated region
        $region57: #{tpu_custom_call.1} parent=39 // pred_check
          %p322 = pneg %p141
        $region58: #{tpu_custom_call.1} parent=39 // pred_check_branch
          %324 = sbr.rel (%p322) target = $region60
        $region59: #{tpu_custom_call.1} parent=39 // pred_region
          %326 = dma.done [#allocation9], 2048
        $region60: #{tpu_custom_call.1} parent=39 // pred_fallthru
          _
        %s327 = sand.u32 %s34, 1
        %s328 = scalar_lea.sflag [#allocation3], %s327
        %s329 = sand.u32 %s34, 1
        %s330 = smul.addr %s329, 32
        %s331 = scalar_lea.vmem [#allocation2], %s330
        %p332 = pneg %p47
        %p333 = pneg %p44
        %s334 = sand.u32 %s26, 1
        %s335 = scalar_lea.sflag [#allocation6], %s334
        %s336 = sand.u32 %s60, 1
        %s337 = smul.addr %s336, 32
        %s338 = scalar_lea.vmem [#allocation5], %s337
        %p339 = pneg %p73
        %p340 = pneg %p70
        %s341 = sand.u32 %s26, 1
        %s342 = scalar_lea.sflag [#allocation6], %s341
        %s343 = sand.u32 %s86, 1
        %s344 = smul.addr %s343, 32
        %s345 = scalar_lea.vmem [#allocation7], %s344
        %p346 = pneg %p99
        %p347 = pneg %p96
        %p348 = pneg %p120
        %p349 = pneg %p117
        %p350 = pneg %p141
        %p351 = pneg %p138
        %p352 = pneg %p167
        %p353 = pneg %p164
        %s354 = sand.u32 %s154, 1
        %s355 = scalar_lea.sflag [#allocation4], %s354
        %s356 = sand.u32 %s154, 1
        %s357 = smul.addr %s356, 32
        %s358 = scalar_lea.vmem [#allocation11], %s357
        %s359 = smul.u32 4, %s26
        %s360 = smul.u32 4, %s26
        %s361 = smul.u32 4, %s26
        %s362 = smul.u32 4, %s26
        %v363 = vld [vmem:[%s301] sm:$0xff]
        %v364 = vld [vmem:[%s301 + $0x8] sm:$0xff]
        %v365 = vld [vmem:[%s301 + $0x10] sm:$0xff]
        %v366 = vld [vmem:[%s301 + $0x18] sm:$0xff]
        %v367 = vld [vmem:[#allocation8] sm:$0xff]
        %v368 = vld [vmem:[#allocation8 + $0x8] sm:$0xff]
        %v369 = vld [vmem:[#allocation8 + $0x10] sm:$0xff]
        %v370 = vld [vmem:[#allocation8 + $0x18] sm:$0xff]
        %v371 = vld [vmem:[#allocation8 + $0x20] sm:$0xff]
        %v372 = vld [vmem:[#allocation8 + $0x28] sm:$0xff]
        %v373 = vld [vmem:[#allocation8 + $0x30] sm:$0xff]
        %v374 = vld [vmem:[#allocation8 + $0x38] sm:$0xff]
        %v375 = vld [vmem:[#allocation8 + $0x40] sm:$0xff]
        %v376 = vld [vmem:[#allocation8 + $0x48] sm:$0xff]
        %v377 = vld [vmem:[#allocation8 + $0x50] sm:$0xff]
        %v378 = vld [vmem:[#allocation8 + $0x58] sm:$0xff]
        %v379 = vld [vmem:[#allocation8 + $0x60] sm:$0xff]
        %v380 = vld [vmem:[#allocation8 + $0x68] sm:$0xff]
        %v381 = vld [vmem:[#allocation8 + $0x70] sm:$0xff]
        %v382 = vld [vmem:[#allocation8 + $0x78] sm:$0xff]
        %v383 = vld [vmem:[%s311] sm:$0xff]
        %v384 = vld [vmem:[%s311 + $0x8] sm:$0xff]
        %v385 = vld [vmem:[%s311 + $0x10] sm:$0xff]
        %v386 = vld [vmem:[%s311 + $0x18] sm:$0xff]
        %v387 = vld [vmem:[#allocation10] sm:$0xff]
        %v388 = vld [vmem:[#allocation10 + $0x8] sm:$0xff]
        %v389 = vld [vmem:[#allocation10 + $0x10] sm:$0xff]
        %v390 = vld [vmem:[#allocation10 + $0x18] sm:$0xff]
        %v391 = vld [vmem:[#allocation10 + $0x20] sm:$0xff]
        %v392 = vld [vmem:[#allocation10 + $0x28] sm:$0xff]
        %v393 = vld [vmem:[#allocation10 + $0x30] sm:$0xff]
        %v394 = vld [vmem:[#allocation10 + $0x38] sm:$0xff]
        %v395 = vld [vmem:[#allocation10 + $0x40] sm:$0xff]
        %v396 = vld [vmem:[#allocation10 + $0x48] sm:$0xff]
        %v397 = vld [vmem:[#allocation10 + $0x50] sm:$0xff]
        %v398 = vld [vmem:[#allocation10 + $0x58] sm:$0xff]
        %v399 = vld [vmem:[#allocation10 + $0x60] sm:$0xff]
        %v400 = vld [vmem:[#allocation10 + $0x68] sm:$0xff]
        %v401 = vld [vmem:[#allocation10 + $0x70] sm:$0xff]
        %v402 = vld [vmem:[#allocation10 + $0x78] sm:$0xff]
        %403 = vmatpush.msra.mxu0 %v402
        %404 = vmatpush.msra.mxu0 %v401
        %405 = vmatpush.msra.mxu0 %v400
        %406 = vmatpush.msra.mxu0 %v399
        %407 = vmatpush.msra.mxu0 %v398
        %408 = vmatpush.msra.mxu0 %v397
        %409 = vmatpush.msra.mxu0 %v396
        %410 = vmatpush.msra.mxu0 %v395
        %411 = vmatpush.msra.mxu0 %v394
        %412 = vmatpush.msra.mxu0 %v393
        %413 = vmatpush.msra.mxu0 %v392
        %414 = vmatpush.msra.mxu0 %v391
        %415 = vmatpush.msra.mxu0 %v390
        %416 = vmatpush.msra.mxu0 %v389
        %417 = vmatpush.msra.mxu0 %v388
        %418 = vmatpush.msra.mxu0 %v387
        %419 = vmatmul.f32.gmra.mxu0 %v383
        %v420 = vpop.f32.mrf.mxu0
        %v421 = vadd.f32 0.0, %v420
        %422 = vmatmul.f32.gmra.mxu0 %v384
        %v423 = vpop.f32.mrf.mxu0
        %v424 = vadd.f32 0.0, %v423
        %425 = vmatmul.f32.gmra.mxu0 %v385
        %v426 = vpop.f32.mrf.mxu0
        %v427 = vadd.f32 0.0, %v426
        %428 = vmatmul.f32.gmra.mxu0 %v386
        %v429 = vpop.f32.mrf.mxu0
        %v430 = vadd.f32 0.0, %v429
        %431 = vdwg.mxu0
        %432 = vmatpush.msra.mxu0 %v382
        %433 = vmatpush.msra.mxu0 %v381
        %434 = vmatpush.msra.mxu0 %v380
        %435 = vmatpush.msra.mxu0 %v379
        %436 = vmatpush.msra.mxu0 %v378
        %437 = vmatpush.msra.mxu0 %v377
        %438 = vmatpush.msra.mxu0 %v376
        %439 = vmatpush.msra.mxu0 %v375
        %440 = vmatpush.msra.mxu0 %v374
        %441 = vmatpush.msra.mxu0 %v373
        %442 = vmatpush.msra.mxu0 %v372
        %443 = vmatpush.msra.mxu0 %v371
        %444 = vmatpush.msra.mxu0 %v370
        %445 = vmatpush.msra.mxu0 %v369
        %446 = vmatpush.msra.mxu0 %v368
        %447 = vmatpush.msra.mxu0 %v367
        %448 = vmatmul.f32.gmra.mxu0 %v363
        %v449 = vpop.f32.mrf.mxu0
        %v450 = vadd.f32 %v421, %v449
        %451 = vmatmul.f32.gmra.mxu0 %v364
        %v452 = vpop.f32.mrf.mxu0
        %v453 = vadd.f32 %v424, %v452
        %454 = vmatmul.f32.gmra.mxu0 %v365
        %v455 = vpop.f32.mrf.mxu0
        %v456 = vadd.f32 %v427, %v455
        %457 = vmatmul.f32.gmra.mxu0 %v366
        %v458 = vpop.f32.mrf.mxu0
        %v459 = vadd.f32 %v430, %v458
        %460 = vdwg.mxu0
        %v461 = vld [vmem:[%s291] sm:$0xff]
        %v462 = vld [vmem:[%s291 + $0x8] sm:$0xff]
        %v463 = vld [vmem:[%s291 + $0x10] sm:$0xff]
        %v464 = vld [vmem:[%s291 + $0x18] sm:$0xff]
        %v465 = vmul.f32 %v450, %v461
        %v466 = vmul.f32 %v453, %v462
        %v467 = vmul.f32 %v456, %v463
        %v468 = vmul.f32 %v459, %v464
        %v469 = vtanh.pop %v465
        %v470 = vtanh.pop %v466
        %v471 = vtanh.pop %v467
        %v472 = vtanh.pop %v468
        %473 = vst [vmem:[%s358] sm:$0xff] %v469
        %474 = vst [vmem:[%s358 + $0x8] sm:$0xff] %v470
        %475 = vst [vmem:[%s358 + $0x10] sm:$0xff] %v471
        %476 = vst [vmem:[%s358 + $0x18] sm:$0xff] %v472
        %s477 = sand.u32 %s154, 1
        %s478 = scalar_lea.sflag [#allocation4], %s477
        %s479 = sand.u32 %s154, 1
        %s480 = smul.addr %s479, 32
        %s481 = scalar_lea.vmem [#allocation11], %s480
        // Predicated region
        $region61: #{tpu_custom_call.1} parent=39 // pred_check
          %p482 = pneg %p164
        $region62: #{tpu_custom_call.1} parent=39 // pred_check_branch
          %484 = sbr.rel (%p482) target = $region64
        $region63: #{tpu_custom_call.1} parent=39 // pred_region
          %s485 = smul.u32 4, %s26
          %487 = vsyncadd %s478, 0
          %s488 = smul.addr %s485, 8
          %s489 = scalar_lea.hbm %s5, %s488
          %s490 = sshll.u32 %s481, 4
          %s491 = int_to_ptr.vmem [resolvable:$true] %s490
          %s492 = sshll.u32 %s489, 4
          %s493 = int_to_ptr.hbm [resolvable:$true] %s492
          %498 = dma.vmem_to_hbm [thread:$0]  %s491, 512, %s493, %s478, 128, 128, 8
        $region64: #{tpu_custom_call.1} parent=39 // pred_fallthru
          _
      $region40: #{tpu_custom_call.1} parent=5 // pred_fallthru
        _
      %p499 = scmp.le.s32.totalorder 2, %s21
      // Predicated region
      $region65: #{tpu_custom_call.1} parent=5 // pred_check
        %p500 = pneg %p499
      $region66: #{tpu_custom_call.1} parent=5 // pred_check_branch
        %502 = sbr.rel (%p500) target = $region68
      $region67: #{tpu_custom_call.1} parent=5 // pred_region
        %s503 = ssub.s32 %s21, 2
        // Predicated region
        $region69: #{tpu_custom_call.1} parent=67 // pred_check
          %p504 = pneg %p170
        $region70: #{tpu_custom_call.1} parent=67 // pred_check_branch
          %506 = sbr.rel (%p504) target = $region72
        $region71: #{tpu_custom_call.1} parent=67 // pred_region
          %s507 = sand.u32 %s155, 1
          %s508 = scalar_lea.sflag [#allocation4], %s507
          %s509 = sand.u32 %s155, 1
          %s510 = smul.addr %s509, 32
          %s511 = scalar_lea.vmem [#allocation11], %s510
          %513 = dma.done %s508, 512
        $region72: #{tpu_custom_call.1} parent=67 // pred_fallthru
          _
      $region68: #{tpu_custom_call.1} parent=5 // pred_fallthru
        _
    $region6: #{tpu_custom_call.1} parent=1 // loop_footer
      %s25 = sadd.s32 1, %s21
    $region7: #{tpu_custom_call.1} parent=1 // loop_footer_branch
      %20 = sbr.rel target = $region3
    $region8: #{tpu_custom_call.1} parent=1 // loop_exit
      _
    %514 = vsyncpa [#allocation3], 1
    %s515 = scalar_lea.sflag [#allocation3], 1
    %516 = vsyncpa %s515, 1
    %517 = vsyncpa [#allocation6], 1
    %s518 = scalar_lea.sflag [#allocation6], 1
    %519 = vsyncpa %s518, 1
    %520 = vsyncpa [#allocation9], 1
    %521 = vsyncpa [#allocation4], 1
    %s522 = scalar_lea.sflag [#allocation4], 1
    %523 = vsyncpa %s522, 1

</llo_original>
